<compile_context>
chip_gen: v6e
topology: v6e:2x2x1
jax: 0.10.0
libtpu: 0.0.40
codegen_flags: <defaults>
</compile_context>

<pallas_src>
import functools

import jax
import jax.numpy as jnp
from jax.experimental import pallas as pl
from jax.experimental.pallas import tpu as pltpu


def _round_up(x: int, m: int) -> int:
    return ((x + m - 1) // m) * m


def _cdiv(a: int, b: int) -> int:
    return -(-a // b)


# --------------------------------- kernels ---------------------------------
def _neg_sum_kernel(x_ref, out_ref, *, m_neg, n_valid, block_l):
    """Partial sum of relu(x - m_neg)^2 over one (8, block_l) lane tile."""
    x = x_ref[...].astype(jnp.float32)
    neg = jnp.maximum(x - m_neg, 0.0)
    v = neg * neg
    if n_valid is not None:  # ragged lane tail of the last grid block
        col = (jax.lax.broadcasted_iota(jnp.int32, x.shape, 1)
               + pl.program_id(0) * block_l)
        v = jnp.where(col < n_valid, v, 0.0)
    out_ref[0, 0] = jnp.sum(v)


def _blend_sum_kernel(x_ref, t_ref, out_ref, *, m_pos, m_neg, lambda_,
                      n_valid, block_l):
    """Partial sum of t*relu(m_pos-x)^2 + lambda*(1-t)*relu(x-m_neg)^2."""
    x = x_ref[...].astype(jnp.float32)
    t = t_ref[...].astype(jnp.float32)
    pos = jnp.maximum(m_pos - x, 0.0)
    neg = jnp.maximum(x - m_neg, 0.0)
    v = t * (pos * pos) + (lambda_ * (1.0 - t)) * (neg * neg)
    if n_valid is not None:
        col = (jax.lax.broadcasted_iota(jnp.int32, x.shape, 1)
               + pl.program_id(0) * block_l)
        v = jnp.where(col < n_valid, v, 0.0)
    out_ref[0, 0] = jnp.sum(v)


# --------------------------------- wrapper ----------------------------------
def margin_loss(lengths, targets, *, m_pos=0.9, m_neg=0.1, lambda_=0.5,
                binary_class=False, size_average=False,
                block_lanes=131072, vmem_limit_bytes=32 * 1024 * 1024):
    """Pallas implementation of MarginLoss.forward.

    lengths: (B, C) capsule lengths (any float dtype; up-cast in-kernel).
    targets: (B,) int class labels if binary_class=False,
             (B, C) float 0/1 (or soft) mask if binary_class=True.
    """
    B, C = lengths.shape
    N = B * C

    x_flat = lengths.reshape(-1)                         # free (bitcast) reshape
    t_flat = targets.reshape(-1) if binary_class else None

    # Rare ragged case (B*C not a multiple of 8): pad the flat stream by < 8
    # neutral elements (length=m_neg -> neg term 0; target weight 0 -> pos 0).
    rem8 = N % 8
    if rem8:
        padn = 8 - rem8
        x_flat = jnp.pad(x_flat, (0, padn), constant_values=float(m_neg))
        if binary_class:
            t_flat = jnp.pad(t_flat, (0, padn), constant_values=0)
    Np = N + ((8 - rem8) if rem8 else 0)
    N8 = Np // 8

    x2 = x_flat.reshape(8, N8)                           # free (bitcast) reshape
    t2 = t_flat.reshape(8, N8) if binary_class else None

    # ---- lane-tile sizing: VMEM-budget aware, keep >=2 steps for megacore ----
    bytes_per_lane = 8 * jnp.dtype(lengths.dtype).itemsize
    if binary_class:
        bytes_per_lane += 8 * jnp.dtype(targets.dtype).itemsize
    budget = max(int(vmem_limit_bytes) - 2 * 1024 * 1024, 1 * 1024 * 1024)
    max_lanes = max(128, (budget // (2 * bytes_per_lane)) // 128 * 128)
    block_l = max(128, (min(int(block_lanes), max_lanes) // 128) * 128)
    if N8 >= 256:   # ensure grid >= 2 so ("parallel",) uses both v7x TCs
        block_l = min(block_l, _round_up(_cdiv(N8, 2), 128))

    if N8 <= block_l:
        block_l = N8                                     # single full-extent block
        grid_l = 1
        n_valid = None
    else:
        grid_l = _cdiv(N8, block_l)
        n_valid = N8 if (N8 % block_l) else None         # mask only if ragged

    if binary_class:
        kernel = functools.partial(
            _blend_sum_kernel, m_pos=float(m_pos), m_neg=float(m_neg),
            lambda_=float(lambda_), n_valid=n_valid, block_l=block_l)
        inputs = (x2, t2)
        in_specs = [pl.BlockSpec((8, block_l), lambda i: (0, i)),
                    pl.BlockSpec((8, block_l), lambda i: (0, i))]
        flops = 12 * Np
    else:
        kernel = functools.partial(
            _neg_sum_kernel, m_neg=float(m_neg), n_valid=n_valid,
            block_l=block_l)
        inputs = (x2,)
        in_specs = [pl.BlockSpec((8, block_l), lambda i: (0, i))]
        flops = 6 * Np

    bytes_accessed = sum(int(a.size) * jnp.dtype(a.dtype).itemsize
                         for a in inputs) + grid_l * 4

    partials = pl.pallas_call(
        kernel,
        out_shape=jax.ShapeDtypeStruct((grid_l, 1), jnp.float32),
        grid=(grid_l,),
        in_specs=in_specs,
        # Each grid step owns its own SMEM partial-sum block, so the lane-tile
        # axis stays "parallel" (shards the HBM stream across both v7x TCs).
        out_specs=pl.BlockSpec((1, 1), lambda i: (i, 0),
                               memory_space=pltpu.SMEM),
        compiler_params=pltpu.CompilerParams(
            dimension_semantics=("parallel",),
            vmem_limit_bytes=int(vmem_limit_bytes)),
        cost_estimate=pl.CostEstimate(flops=int(flops), transcendentals=0,
                                      bytes_accessed=int(bytes_accessed)),
    )(*inputs)

    kernel_sum = jnp.sum(partials)

    if binary_class:
        total = kernel_sum
    else:
        # O(B) correction: add the one-hot positive term and remove the
        # double-counted negative term at each row's target class.
        # TODO(synk): this tiny B-element gather epilogue stays in XLA — it has
        # no efficient tiled BlockSpec expression; the heavy B*C stream above
        # is fully in the Pallas kernel.
        idx = targets.astype(jnp.int32).reshape(-1, 1)
        x_t = jnp.take_along_axis(lengths, idx, axis=1)[:, 0].astype(jnp.float32)
        pos_t = jnp.maximum(float(m_pos) - x_t, 0.0)
        neg_t = jnp.maximum(x_t - float(m_neg), 0.0)
        corr = jnp.sum(pos_t * pos_t - float(lambda_) * (neg_t * neg_t))
        total = float(lambda_) * kernel_sum + corr

    if size_average:
        total = total / jnp.float32(B * C)
    return total


# ---------------------------- references (pure JAX) ----------------------------
def _reference_mask(lengths, t, m_pos=0.9, m_neg=0.1, lambda_=0.5,
                    size_average=False):
    lengths = lengths.astype(jnp.float32)
    t = t.astype(jnp.float32)
    losses = (t * jnp.maximum(m_pos - lengths, 0.0) ** 2
              + lambda_ * (1.0 - t) * jnp.maximum(lengths - m_neg, 0.0) ** 2)
    return losses.mean() if size_average else losses.sum()


def _reference_index(lengths, targets, **kw):
    t = jax.nn.one_hot(targets, lengths.shape[1], dtype=jnp.float32)
    return _reference_mask(lengths, t, **kw)


if __name__ == "__main__":
    key = jax.random.PRNGKey(0)
    k1, k2, k3, k4, k5 = jax.random.split(key, 5)

    # Case 1: classic capsule-net shapes (N == 128 -> single dense block).
    B, C = 8, 16
    lengths = jax.random.uniform(k1, (B, C), dtype=jnp.float32)
    targets = jax.random.randint(k2, (B,), 0, C, dtype=jnp.int32)

    loss = jax.block_until_ready(margin_loss(lengths, targets))
    ref = _reference_index(lengths, targets)
    assert jnp.allclose(loss, ref, rtol=1e-5, atol=1e-4), (loss, ref)

    loss_avg = jax.block_until_ready(margin_loss(lengths, targets, size_average=True))
    ref_avg = _reference_index(lengths, targets, size_average=True)
    assert jnp.allclose(loss_avg, ref_avg, rtol=1e-5, atol=1e-4), (loss_avg, ref_avg)

    # Case 2: multi-step grid + in-kernel ragged-lane masking (N8 = 375).
    B2, C2 = 300, 10
    lengths2 = jax.random.uniform(k3, (B2, C2), dtype=jnp.float32)
    targets2 = jax.random.randint(k4, (B2,), 0, C2, dtype=jnp.int32)
    loss2 = jax.block_until_ready(margin_loss(lengths2, targets2))
    ref2 = _reference_index(lengths2, targets2)
    assert jnp.allclose(loss2, ref2, rtol=1e-5, atol=1e-4), (loss2, ref2)

    # Case 3: binary_class=True path with a (B, C) multi-hot float target mask.
    tgt_multi = (jax.random.uniform(k2, (B, C)) > 0.8).astype(jnp.float32)
    loss3 = jax.block_until_ready(margin_loss(lengths, tgt_multi, binary_class=True))
    ref3 = _reference_mask(lengths, tgt_multi)
    assert jnp.allclose(loss3, ref3, rtol=1e-5, atol=1e-4), (loss3, ref3)

    # Case 4: binary path with multi-step grid + masking.
    tgt_multi2 = (jax.random.uniform(k4, (B2, C2)) > 0.7).astype(jnp.float32)
    loss4 = jax.block_until_ready(margin_loss(lengths2, tgt_multi2, binary_class=True))
    ref4 = _reference_mask(lengths2, tgt_multi2)
    assert jnp.allclose(loss4, ref4, rtol=1e-5, atol=1e-4), (loss4, ref4)

    # Case 5: rare B*C % 8 != 0 path (tiny neutral flat pad), index targets.
    B5, C5 = 5, 3
    lengths5 = jax.random.uniform(k5, (B5, C5), dtype=jnp.float32)
    targets5 = jax.random.randint(k1, (B5,), 0, C5, dtype=jnp.int32)
    loss5 = jax.block_until_ready(margin_loss(lengths5, targets5))
    ref5 = _reference_index(lengths5, targets5)
    assert jnp.allclose(loss5, ref5, rtol=1e-5, atol=1e-4), (loss5, ref5)

    # Case 6: bf16 streaming (halved HBM traffic); math is f32 in-register.
    lengths6 = lengths2.astype(jnp.bfloat16)
    loss6 = jax.block_until_ready(margin_loss(lengths6, targets2))
    ref6 = _reference_index(lengths6.astype(jnp.float32), targets2)
    assert jnp.allclose(loss6, ref6, rtol=1e-4, atol=1e-3), (loss6, ref6)

    print("KERNEL_OK")
</pallas_src>

<mosaic_0001>
module attributes {stable_mosaic.version = 11 : i64} {
  func.func @_neg_sum_kernel(%arg0: i32, %arg1: memref<8x16xf32, #tpu.memory_space<vmem>>, %arg2: memref<1x1xf32, #tpu.memory_space<smem>>) attributes {dimension_semantics = [#tpu.dimension_semantics<parallel>], iteration_bounds = array<i64: 1>, scalar_prefetch = 0 : i64, scratch_operands = 0 : i64, tpu.core_type = #tpu.core_type<tc>, window_params = [{transform_indices = @transform_0, window_bounds = array<i64: 8, 16>}, {transform_indices = @transform_1, window_bounds = array<i64: 1, 1>}]} {
    %c0 = arith.constant 0 : index
    %c0_0 = arith.constant 0 : index
    %0 = vector.load %arg1[%c0, %c0_0] : memref<8x16xf32, #tpu.memory_space<vmem>>, vector<8x16xf32>
    %cst = arith.constant 1.000000e-01 : f32
    %1 = vector.broadcast %cst : f32 to vector<8x16xf32>
    %2 = arith.subf %0, %1 : vector<8x16xf32>
    %cst_1 = arith.constant 0.000000e+00 : f32
    %3 = vector.broadcast %cst_1 : f32 to vector<8x16xf32>
    %4 = arith.maximumf %2, %3 : vector<8x16xf32>
    %5 = arith.mulf %4, %4 : vector<8x16xf32>
    %6 = vector.shape_cast %5 : vector<8x16xf32> to vector<1x8x16xf32>
    %cst_2 = arith.constant dense<0.000000e+00> : vector<1xf32>
    %7 = vector.multi_reduction <add>, %6, %cst_2 [1, 2] : vector<1x8x16xf32> to vector<1xf32>
    %8 = vector.shape_cast %7 : vector<1xf32> to vector<1x1x1xf32>
    %9 = vector.extract %8[0, 0, 0] : f32 from vector<1x1x1xf32>
    %c0_3 = arith.constant 0 : index
    %c0_4 = arith.constant 0 : index
    %10 = memref.load %arg2[%c0_3, %c0_4] : memref<1x1xf32, #tpu.memory_space<smem>>
    memref.store %9, %arg2[%c0_3, %c0_4] : memref<1x1xf32, #tpu.memory_space<smem>>
    return
  }
  func.func @transform_0(%arg0: i32) -> (i32, i32) {
    %c0_i32 = arith.constant 0 : i32
    %c0_i32_0 = arith.constant 0 : i32
    return %c0_i32, %arg0 : i32, i32
  }
  func.func @transform_1(%arg0: i32) -> (i32, i32) {
    %c0_i32 = arith.constant 0 : i32
    %c0_i32_0 = arith.constant 0 : i32
    return %arg0, %c0_i32 : i32, i32
  }
}

</mosaic_0001>

<llo_original>
// kernel: tpu_custom_call.1
$region0: #{tpu_custom_call.1}
  #allocation0 [shape = 'u32[]', space=smem, size = 0x4, offset = 0x4, fixed_abs, tag = 'smem constant byte address 0x4 - core index']
  #allocation1 [shape = 'u32[144,128]{1,0:T(1,128)}', space=vmem, size = 0x12000, scoped, tag = 'internal scratch']
  %s0 = inlined_call_operand.hbm [shape: f32[8,16], index: 0, kind: input, shape index: {}]
  %s1 = inlined_call_operand.hbm [shape: f32[1,1], index: 1, kind: output, shape index: {}]
  %s2 = sld [smem:[#allocation0]]
  $region18: #{tpu_custom_call.1} parent=0
    _
  %s4 = ssub.s32 1, %s2
  %s5 = scalar_select 0, %s4, %s2
  $region1: #{tpu_custom_call.1} parent=0
    #allocation2 [shape = 'u8[4096]{0}', space=vmem, size = 0x1000, scoped, tag = 'input window, operand 0, single buffered']
    #allocation3 [shape = 's32[1]{0}', space=sflag, size = 0x4, scoped, tag = 'scoped memory for tpu_custom_call.1']
    #allocation4 [shape = 's32[1]{0}', space=sflag, size = 0x4, scoped, tag = 'scoped memory for tpu_custom_call.1']
    #allocation5 [shape = 'u8[512]{0}', space=smem, size = 0x200, scoped, tag = 'output window, operand 0, single buffered']
    %6 = vsyncpa [#allocation3], 0
    %7 = vsyncpa [#allocation4], 0
    // Predicated region
    $region2: #{tpu_custom_call.1} parent=1 // pred_check
      _
    $region3: #{tpu_custom_call.1} parent=1 // pred_check_branch
      %9 = sbr.rel (0) target = $region5
    $region4: #{tpu_custom_call.1} parent=1 // pred_region
      %s11 = ssub.s32 128, 128
      %12 = vsyncadd [#allocation3], %s11
      %s14 = sshll.u32 [#allocation2], 4
      %s15 = int_to_ptr.vmem [resolvable:$true] %s14
      %17 = dma.hbm_to_vmem [thread:$0]  %s0, 128, %s15, [#allocation3]
    $region5: #{tpu_custom_call.1} parent=1 // pred_fallthru
      _
    // Predicated region
    $region6: #{tpu_custom_call.1} parent=1 // pred_check
      _
    $region7: #{tpu_custom_call.1} parent=1 // pred_check_branch
      %19 = sbr.rel (0) target = $region9
    $region8: #{tpu_custom_call.1} parent=1 // pred_region
      %20 = dma.done [#allocation3], 128
    $region9: #{tpu_custom_call.1} parent=1 // pred_fallthru
      _
    %v21 = vld [vmem:[#allocation2] sm:$0xff]
    %v22 = vsub.f32 %v21, 0.1
    %v23 = vmax.f32 %v22, 0.0
    %v24 = vmul.f32 %v23, %v23
    %vm25 = vcmask 130048
    %v26 = vsel %vm25, %v24, 0.0
    %27 = vadd.xlane.f32.xlu0 %v26
    %v28 = vpop.xlane.xlu0 %27
    %v29 = vrot.slane %v28, 4
    %v30 = vadd.f32 %v28, %v29
    %v31 = vrot.slane %v30, 2
    %v32 = vadd.f32 %v30, %v31
    %v33 = vrot.slane %v32, 1
    %v34 = vadd.f32 %v32, %v33
    %s35 = vtos %v34
    %s36 = scalar_lea.smem [#allocation5], 0
    %37 = sst [smem:[%s36]] %s35
    // Predicated region
    $region10: #{tpu_custom_call.1} parent=1 // pred_check
      _
    $region11: #{tpu_custom_call.1} parent=1 // pred_check_branch
      %39 = sbr.rel (0) target = $region13
    $region12: #{tpu_custom_call.1} parent=1 // pred_region
      %s41 = ssub.s32 16, 16
      %42 = vsyncadd [#allocation4], %s41
      %45 = dma.smem_to_hbm [#allocation5], 16, %s1, [#allocation4]
    $region13: #{tpu_custom_call.1} parent=1 // pred_fallthru
      _
    // Predicated region
    $region14: #{tpu_custom_call.1} parent=1 // pred_check
      _
    $region15: #{tpu_custom_call.1} parent=1 // pred_check_branch
      %47 = sbr.rel (0) target = $region17
    $region16: #{tpu_custom_call.1} parent=1 // pred_region
      %48 = dma.done [#allocation4], 16
    $region17: #{tpu_custom_call.1} parent=1 // pred_fallthru
      _
    %49 = sfence
    %50 = vsyncpa [#allocation3], 1
    %51 = vsyncpa [#allocation4], 1

</llo_original>
